<compile_context>
chip_gen: v6e
topology: v6e:2x2x1
jax: 0.10.0
libtpu: 0.0.40
codegen_flags: <defaults>
</compile_context>

<pallas_src>
import functools

import jax
import jax.numpy as jnp
import numpy as np
from jax import lax
from jax.experimental import pallas as pl
from jax.experimental.pallas import tpu as pltpu

_LANES = 128


def _recon_partial_kernel(x_ref, y_ref, out_ref, *, valid_rows, row_tile):
    """One grid step: out[0, :] = sum over rows of |x - y| for this block."""
    d = jnp.abs(x_ref[...].astype(jnp.float32) - y_ref[...].astype(jnp.float32))

    if valid_rows is None:
        # Every block is fully in-bounds: branch-free lane-dense partial sum.
        out_ref[...] = jnp.sum(d, axis=0, keepdims=True)
    else:
        last = pl.num_programs(0) - 1

        @pl.when(pl.program_id(0) != last)
        def _():
            out_ref[...] = jnp.sum(d, axis=0, keepdims=True)

        @pl.when(pl.program_id(0) == last)
        def _():
            # Last block overhangs the array; zero the unspecified OOB rows.
            row_idx = pl.program_id(0) * row_tile + lax.broadcasted_iota(
                jnp.int32, d.shape, 0
            )
            dm = jnp.where(row_idx < valid_rows, d, jnp.float32(0.0))
            out_ref[...] = jnp.sum(dm, axis=0, keepdims=True)


def _stream_dtype(a):
    # Stream f32 / bf16 natively; fp16 -> bf16 (keeps HBM bytes at 2/elem);
    # anything else (ints, f64) -> f32.
    if a.dtype in (jnp.float32, jnp.bfloat16):
        return a
    if a.dtype == jnp.float16:
        return a.astype(jnp.bfloat16)
    return a.astype(jnp.float32)


def reconstruction_loss(
    x,
    label,
    *,
    target_block_bytes=8 * 1024 * 1024,
    min_pallas_bytes=1 << 20,
):
    """x, label: (B, C, H, W). Returns scalar f32 loss matching the PyTorch module."""
    assert x.shape == label.shape
    B = x.shape[0]
    total = int(np.prod(x.shape))

    x = _stream_dtype(x)
    label = _stream_dtype(label)
    itemsize = max(jnp.dtype(x.dtype).itemsize, jnp.dtype(label.dtype).itemsize)

    # Small-tensor fast path: a single fused XLA reduction beats kernel launch.
    if total * itemsize < min_pallas_bytes:
        return jnp.sum(
            jnp.abs(x.astype(jnp.float32) - label.astype(jnp.float32))
        ) / jnp.float32(B)

    xf = jnp.reshape(x, (-1,))
    lf = jnp.reshape(label, (-1,))

    rows = total // _LANES
    main = rows * _LANES

    # <128-element remainder: handled in plain JAX (no full-tensor pad pass).
    tail = jnp.float32(0.0)
    if main < total:
        tail = jnp.sum(
            jnp.abs(xf[main:].astype(jnp.float32) - lf[main:].astype(jnp.float32))
        )
    if rows == 0:
        return tail / jnp.float32(B)

    xm = xf[:main].reshape(rows, _LANES)
    lm = lf[:main].reshape(rows, _LANES)

    # Row-tile sized for ~target_block_bytes per input per step, multiple of 8.
    max_rows = max(8, (target_block_bytes // (_LANES * itemsize)) // 8 * 8)
    block_bytes = rows * _LANES * itemsize
    if rows > max_rows:
        row_tile = max_rows
    elif block_bytes > (1 << 20):
        # Mid-size tensor: force >= 2 grid blocks so both v7x TensorCores
        # (grid axis is "parallel") actually get work.
        row_tile = min(rows, ((-(-rows // 2)) + 7) // 8 * 8)
    else:
        row_tile = rows  # single full-extent block (any size allowed)

    num_blocks = -(-rows // row_tile)
    valid_rows = rows if (rows % row_tile) != 0 else None  # mask only uneven tail

    kernel = functools.partial(
        _recon_partial_kernel, valid_rows=valid_rows, row_tile=row_tile
    )

    partials = pl.pallas_call(
        kernel,
        out_shape=jax.ShapeDtypeStruct((num_blocks, _LANES), jnp.float32),
        grid_spec=pltpu.PrefetchScalarGridSpec(
            num_scalar_prefetch=0,
            grid=(num_blocks,),
            in_specs=[
                pl.BlockSpec((row_tile, _LANES), lambda i: (i, 0)),
                pl.BlockSpec((row_tile, _LANES), lambda i: (i, 0)),
            ],
            out_specs=pl.BlockSpec((1, _LANES), lambda i: (i, 0)),
        ),
        compiler_params=pltpu.CompilerParams(
            dimension_semantics=("parallel",),  # independent blocks -> megacore OK
            vmem_limit_bytes=40 * 1024 * 1024,
        ),
    )(xm, lm)

    # Tiny final cross-lane/cross-block reduction + mean-over-batch in JAX.
    return (jnp.sum(partials) + tail) / jnp.float32(B)


if __name__ == "__main__":
    key = jax.random.PRNGKey(0)
    kx, kl = jax.random.split(key)

    # 1) Small canonical shape, forcing the Pallas path (fast path disabled).
    B, C, H, W = 2, 4, 16, 16
    x = jax.random.normal(kx, (B, C, H, W), dtype=jnp.float32)
    label = jax.random.normal(kl, (B, C, H, W), dtype=jnp.float32)

    loss = jax.block_until_ready(reconstruction_loss(x, label, min_pallas_bytes=0))
    ref = jnp.mean(jnp.sum(jnp.abs(x - label), axis=(1, 2, 3)), axis=0)
    np.testing.assert_allclose(np.asarray(loss), np.asarray(ref), rtol=1e-5, atol=1e-5)

    # 2) Shape with no multiple-of-128 factor -> exercises the JAX tail path.
    x2 = jax.random.normal(kx, (2, 3, 7, 5), dtype=jnp.float32)
    l2 = jax.random.normal(kl, (2, 3, 7, 5), dtype=jnp.float32)
    loss2 = jax.block_until_ready(reconstruction_loss(x2, l2, min_pallas_bytes=0))
    ref2 = jnp.mean(jnp.sum(jnp.abs(x2 - l2), axis=(1, 2, 3)), axis=0)
    np.testing.assert_allclose(np.asarray(loss2), np.asarray(ref2), rtol=1e-5, atol=1e-5)

    # 3) Default call (tiny tensor -> small-tensor fast path).
    loss3 = jax.block_until_ready(reconstruction_loss(x, label))
    np.testing.assert_allclose(np.asarray(loss3), np.asarray(ref), rtol=1e-5, atol=1e-5)

    print("KERNEL_OK")
</pallas_src>

<mosaic_0001>
module attributes {stable_mosaic.version = 11 : i64} {
  func.func @_recon_partial_kernel(%arg0: i32, %arg1: memref<16x128xf32, #tpu.memory_space<vmem>>, %arg2: memref<16x128xf32, #tpu.memory_space<vmem>>, %arg3: memref<1x128xf32, #tpu.memory_space<vmem>>) attributes {dimension_semantics = [#tpu.dimension_semantics<parallel>], iteration_bounds = array<i64: 1>, scalar_prefetch = 0 : i64, scratch_operands = 0 : i64, tpu.core_type = #tpu.core_type<tc>, window_params = [{transform_indices = @transform_0, window_bounds = array<i64: 16, 128>}, {transform_indices = @transform_1, window_bounds = array<i64: 16, 128>}, {transform_indices = @transform_2, window_bounds = array<i64: 1, 128>}]} {
    %c0 = arith.constant 0 : index
    %c0_0 = arith.constant 0 : index
    %0 = vector.load %arg1[%c0, %c0_0] : memref<16x128xf32, #tpu.memory_space<vmem>>, vector<16x128xf32>
    %c0_1 = arith.constant 0 : index
    %c0_2 = arith.constant 0 : index
    %1 = vector.load %arg2[%c0_1, %c0_2] : memref<16x128xf32, #tpu.memory_space<vmem>>, vector<16x128xf32>
    %2 = arith.subf %0, %1 : vector<16x128xf32>
    %3 = math.absf %2 : vector<16x128xf32>
    %cst = arith.constant dense<0.000000e+00> : vector<128xf32>
    %4 = vector.multi_reduction <add>, %3, %cst [0] : vector<16x128xf32> to vector<128xf32>
    %5 = vector.shape_cast %4 : vector<128xf32> to vector<1x128xf32>
    %c0_3 = arith.constant 0 : index
    %c0_4 = arith.constant 0 : index
    %6 = vector.load %arg3[%c0_3, %c0_4] : memref<1x128xf32, #tpu.memory_space<vmem>>, vector<1x128xf32>
    tpu.vector_store %arg3[%c0_3, %c0_4], %5 {strides = array<i32>} : memref<1x128xf32, #tpu.memory_space<vmem>>, vector<1x128xf32>,
    return
  }
  func.func @transform_0(%arg0: i32) -> (i32, i32) {
    %c0_i32 = arith.constant 0 : i32
    %c0_i32_0 = arith.constant 0 : i32
    return %arg0, %c0_i32 : i32, i32
  }
  func.func @transform_1(%arg0: i32) -> (i32, i32) {
    %c0_i32 = arith.constant 0 : i32
    %c0_i32_0 = arith.constant 0 : i32
    return %arg0, %c0_i32 : i32, i32
  }
  func.func @transform_2(%arg0: i32) -> (i32, i32) {
    %c0_i32 = arith.constant 0 : i32
    %c0_i32_0 = arith.constant 0 : i32
    return %arg0, %c0_i32 : i32, i32
  }
}

</mosaic_0001>

<llo_original>
// kernel: tpu_custom_call.1
$region0: #{tpu_custom_call.1}
  #allocation0 [shape = 'u32[]', space=smem, size = 0x4, offset = 0x4, fixed_abs, tag = 'smem constant byte address 0x4 - core index']
  #allocation1 [shape = 'u32[144,128]{1,0:T(1,128)}', space=vmem, size = 0x12000, scoped, tag = 'internal scratch']
  %s0 = inlined_call_operand.hbm [shape: f32[16,128], index: 0, kind: input, shape index: {}]
  %s1 = inlined_call_operand.hbm [shape: f32[16,128], index: 1, kind: input, shape index: {}]
  %s2 = inlined_call_operand.hbm [shape: f32[1,128], index: 2, kind: output, shape index: {}]
  %s3 = sld [smem:[#allocation0]]
  $region26: #{tpu_custom_call.1} parent=0
    _
  %s5 = ssub.s32 1, %s3
  %s6 = scalar_select 0, %s5, %s3
  $region1: #{tpu_custom_call.1} parent=0
    #allocation2 [shape = 'u8[8192]{0}', space=vmem, size = 0x2000, scoped, tag = 'input window, operand 0, single buffered']
    #allocation3 [shape = 's32[1]{0}', space=sflag, size = 0x4, scoped, tag = 'scoped memory for tpu_custom_call.1']
    #allocation4 [shape = 's32[1]{0}', space=sflag, size = 0x4, scoped, tag = 'scoped memory for tpu_custom_call.1']
    #allocation5 [shape = 'u8[8192]{0}', space=vmem, size = 0x2000, scoped, tag = 'input window, operand 1, single buffered']
    #allocation6 [shape = 's32[1]{0}', space=sflag, size = 0x4, scoped, tag = 'scoped memory for tpu_custom_call.1']
    #allocation7 [shape = 'u8[512]{0}', space=vmem, size = 0x400, scoped, tag = 'output window, operand 0, single buffered']
    %7 = vsyncpa [#allocation3], 0
    %8 = vsyncpa [#allocation6], 0
    %9 = vsyncpa [#allocation4], 0
    // Predicated region
    $region2: #{tpu_custom_call.1} parent=1 // pred_check
      _
    $region3: #{tpu_custom_call.1} parent=1 // pred_check_branch
      %11 = sbr.rel (0) target = $region5
    $region4: #{tpu_custom_call.1} parent=1 // pred_region
      %s13 = ssub.s32 256, 256
      %14 = vsyncadd [#allocation3], %s13
      %s15 = sshll.u32 [#allocation2], 4
      %s16 = int_to_ptr.vmem [resolvable:$true] %s15
      %21 = dma.hbm_to_vmem [thread:$0]  %s0, 256, %s16, [#allocation3], 128, 128, 8
    $region5: #{tpu_custom_call.1} parent=1 // pred_fallthru
      _
    // Predicated region
    $region6: #{tpu_custom_call.1} parent=1 // pred_check
      _
    $region7: #{tpu_custom_call.1} parent=1 // pred_check_branch
      %23 = sbr.rel (0) target = $region9
    $region8: #{tpu_custom_call.1} parent=1 // pred_region
      %s25 = ssub.s32 256, 256
      %26 = vsyncadd [#allocation6], %s25
      %s27 = sshll.u32 [#allocation5], 4
      %s28 = int_to_ptr.vmem [resolvable:$true] %s27
      %33 = dma.hbm_to_vmem [thread:$0]  %s1, 256, %s28, [#allocation6], 128, 128, 8
    $region9: #{tpu_custom_call.1} parent=1 // pred_fallthru
      _
    // Predicated region
    $region10: #{tpu_custom_call.1} parent=1 // pred_check
      _
    $region11: #{tpu_custom_call.1} parent=1 // pred_check_branch
      %35 = sbr.rel (0) target = $region13
    $region12: #{tpu_custom_call.1} parent=1 // pred_region
      %36 = dma.done [#allocation3], 256
    $region13: #{tpu_custom_call.1} parent=1 // pred_fallthru
      _
    // Predicated region
    $region14: #{tpu_custom_call.1} parent=1 // pred_check
      _
    $region15: #{tpu_custom_call.1} parent=1 // pred_check_branch
      %38 = sbr.rel (0) target = $region17
    $region16: #{tpu_custom_call.1} parent=1 // pred_region
      %39 = dma.done [#allocation6], 256
    $region17: #{tpu_custom_call.1} parent=1 // pred_fallthru
      _
    %v40 = vld [vmem:[#allocation2] sm:$0xff]
    %v41 = vld [vmem:[#allocation2 + $0x8] sm:$0xff]
    %v42 = vld [vmem:[#allocation5] sm:$0xff]
    %v43 = vld [vmem:[#allocation5 + $0x8] sm:$0xff]
    %v44 = vsub.f32 %v40, %v42
    %v45 = vsub.f32 %v41, %v43
    %v46 = vand.u32 2147483647, %v44
    %v47 = vand.u32 2147483647, %v45
    %v48 = vadd.f32 %v46, %v47
    %v49 = vrot.slane %v48, 4
    %v50 = vadd.f32 %v48, %v49
    %v51 = vrot.slane %v50, 2
    %v52 = vadd.f32 %v50, %v51
    %v53 = vrot.slane %v52, 1
    %v54 = vadd.f32 %v52, %v53
    %55 = vst [vmem:[#allocation7] sm:$0x1] %v54
    // Predicated region
    $region18: #{tpu_custom_call.1} parent=1 // pred_check
      _
    $region19: #{tpu_custom_call.1} parent=1 // pred_check_branch
      %57 = sbr.rel (0) target = $region21
    $region20: #{tpu_custom_call.1} parent=1 // pred_region
      %s59 = ssub.s32 16, 16
      %60 = vsyncadd [#allocation4], %s59
      %s62 = sshll.u32 [#allocation7], 4
      %s63 = int_to_ptr.vmem [resolvable:$true] %s62
      %65 = dma.vmem_to_hbm [thread:$0]  %s63, 16, %s2, [#allocation4]
    $region21: #{tpu_custom_call.1} parent=1 // pred_fallthru
      _
    // Predicated region
    $region22: #{tpu_custom_call.1} parent=1 // pred_check
      _
    $region23: #{tpu_custom_call.1} parent=1 // pred_check_branch
      %67 = sbr.rel (0) target = $region25
    $region24: #{tpu_custom_call.1} parent=1 // pred_region
      %68 = dma.done [#allocation4], 16
    $region25: #{tpu_custom_call.1} parent=1 // pred_fallthru
      _
    %69 = vsyncpa [#allocation3], 1
    %70 = vsyncpa [#allocation6], 1
    %71 = vsyncpa [#allocation4], 1

</llo_original>
